<compile_context>
chip_gen: v7x
topology: tpu7x:2x2x1
jax: 0.10.0
libtpu: 0.0.40
codegen_flags: <defaults>
</compile_context>

<pallas_src>
import jax
import jax.numpy as jnp
from jax.experimental import pallas as pl
from jax.experimental.pallas import tpu as pltpu


def _round_up(a, b):
    return ((a + b - 1) // b) * b


def my_linear_kernel(x_ref, w1t_ref, params_ref, o_ref):
    # x_ref:      (TM, H) f32   -- cast to bf16 in-kernel (no wrapper-side HBM pass)
    # w1t_ref:    (H, H)  bf16  -- W1 pre-transposed to [in, out]; resident across grid steps
    # params_ref: (8, H)  f32 slab: row 0=b1, 1=gamma, 2=beta, 3=w2 row, 4=b2 (broadcast)
    # o_ref:      (TM, 1) f32
    x = x_ref[...].astype(jnp.bfloat16)          # VPU cast, hidden under the MXU pushes

    # ---- linear_1: x @ W1^T, with W1 already stored transposed -> standard contraction,
    #      no per-step XLU transpose of the resident weight. f32 accumulation on the MXU.
    l1 = jnp.dot(x, w1t_ref[...], preferred_element_type=jnp.float32)   # (TM, H) f32
    l1 = l1 + params_ref[0:1, :]                                        # + b1

    # ---- LayerNorm (eps=1e-5, biased variance), two-pass statistics (no cancellation) ----
    h = l1.shape[-1]
    inv_h = 1.0 / h
    mean = jnp.sum(l1, axis=-1, keepdims=True) * inv_h                  # (TM, 1)
    d = l1 - mean
    var = jnp.sum(d * d, axis=-1, keepdims=True) * inv_h                # (TM, 1)
    inv = jax.lax.rsqrt(var + 1e-5)
    n1 = d * inv * params_ref[1:2, :] + params_ref[2:3, :]

    # ---- LeakyReLU(0.1) ----
    a1 = jnp.where(n1 >= 0, n1, 0.1 * n1)

    # ---- linear_2 (out features = 1): VPU multiply + XLU row reduction (avoid N=1 MXU) ----
    l2 = jnp.sum(a1 * params_ref[3:4, :], axis=-1, keepdims=True)       # (TM, 1)
    l2 = l2 + params_ref[4:5, 0:1]                                      # + b2

    # (TM, 1) masked store accepted knowingly: output bytes are negligible vs x/W1 traffic.
    o_ref[...] = l2.astype(o_ref.dtype)


def my_linear_forward(x, w1, b1, gamma, beta, w2, b2):
    """x: [..., H] float32. w1: [H, H] (PyTorch out x in). w2: [1, H]. Returns [..., 1]."""
    lead = x.shape[:-1]
    H = x.shape[-1]
    x2d = x.reshape(-1, H).astype(jnp.float32)
    M = x2d.shape[0]

    # Round the row count up to a multiple of 16 (bf16 sublane tile); usually a no-op.
    Mp = _round_up(max(M, 16), 16)
    if Mp != M:
        x2d = jnp.pad(x2d, ((0, Mp - M), (0, 0)))   # zero rows: LayerNorm stays finite (eps)

    # Row tile: multiple of 16, <= 1024, and >= 2 grid steps whenever M allows it so the
    # "parallel" grid axis actually uses both v7x TensorCores.
    if Mp >= 32:
        TM = min(1024, _round_up((Mp + 1) // 2, 16))
    else:
        TM = Mp
    G = pl.cdiv(Mp, TM)

    # W1 pre-transposed to [in, out], fused with the bf16 cast (single pass over W1).
    w1t_bf = w1.T.astype(jnp.bfloat16)

    # Fused f32 parameter slab (one small DMA instead of five tiny sublane-padded ones).
    params = jnp.zeros((8, H), dtype=jnp.float32)
    params = params.at[0].set(b1.astype(jnp.float32))
    params = params.at[1].set(gamma.astype(jnp.float32))
    params = params.at[2].set(beta.astype(jnp.float32))
    params = params.at[3].set(w2.reshape(H).astype(jnp.float32))
    params = params.at[4].set(jnp.full((H,), b2.reshape(-1)[0], dtype=jnp.float32))

    cost = pl.CostEstimate(
        flops=2 * Mp * H * H + 12 * Mp * H,
        transcendentals=Mp,                              # rsqrt per row
        bytes_accessed=Mp * H * 4 + H * H * 2 + 8 * H * 4 + Mp * 4,
    )

    def build(resident_pipeline_mode):
        if resident_pipeline_mode is None:
            def resident_spec(shape):
                return pl.BlockSpec(shape, lambda i: (0, 0))
        else:
            def resident_spec(shape):
                return pl.BlockSpec(shape, lambda i: (0, 0),
                                    pipeline_mode=resident_pipeline_mode)
        return pl.pallas_call(
            my_linear_kernel,
            out_shape=jax.ShapeDtypeStruct((Mp, 1), jnp.float32),
            grid=(G,),
            in_specs=[
                pl.BlockSpec((TM, H), lambda i: (i, 0)),   # x tile: pipelined over M
                resident_spec((H, H)),                     # W1^T: resident, single-buffered
                resident_spec((8, H)),                     # param slab: resident
            ],
            out_specs=pl.BlockSpec((TM, 1), lambda i: (i, 0)),
            compiler_params=pltpu.CompilerParams(
                dimension_semantics=("parallel",),         # shard M over v7x's 2 TCs
                vmem_limit_bytes=48 * 1024 * 1024,         # fits v7x's 64 MiB physical VMEM
            ),
            cost_estimate=cost,
        )

    try:
        out = build(pl.Buffered(1))(x2d, w1t_bf, params)
    except Exception:
        # Fallback for jax versions without single-buffer pipeline_mode support.
        out = build(None)(x2d, w1t_bf, params)

    return out[:M].astype(x.dtype).reshape(*lead, 1)


def reference_forward(x, w1, b1, gamma, beta, w2, b2, match_bf16=True):
    """Pure-JAX reference. match_bf16=True mirrors the kernel's bf16 matmul inputs."""
    lead = x.shape[:-1]
    H = x.shape[-1]
    x2d = x.reshape(-1, H)
    if match_bf16:
        xin = x2d.astype(jnp.bfloat16)
        w1in = w1.astype(jnp.bfloat16)
    else:
        xin, w1in = x2d, w1
    l1 = jax.lax.dot_general(xin, w1in, (((1,), (1,)), ((), ())),
                             preferred_element_type=jnp.float32) + b1
    mean = jnp.mean(l1, axis=-1, keepdims=True)
    var = jnp.mean((l1 - mean) ** 2, axis=-1, keepdims=True)
    n1 = (l1 - mean) * jax.lax.rsqrt(var + 1e-5) * gamma + beta
    a1 = jnp.where(n1 >= 0, n1, 0.1 * n1)
    l2 = a1 @ w2.T.astype(jnp.float32) + b2
    return l2.reshape(*lead, 1)


if __name__ == "__main__":
    H = 32          # hidden_dim (small stand-in for 768)
    B, S = 2, 4     # leading dims -> 8 rows total

    key = jax.random.PRNGKey(0)
    kx, kw1, kw2 = jax.random.split(key, 3)

    x = jax.random.normal(kx, (B, S, H), dtype=jnp.float32)

    # weights_init_uniform: Linear weights ~ U(0, 1), biases = 0
    w1 = jax.random.uniform(kw1, (H, H), dtype=jnp.float32, minval=0.0, maxval=1.0)
    b1 = jnp.zeros((H,), dtype=jnp.float32)
    w2 = jax.random.uniform(kw2, (1, H), dtype=jnp.float32, minval=0.0, maxval=1.0)
    b2 = jnp.zeros((1,), dtype=jnp.float32)
    # LayerNorm default init: weight=1, bias=0
    gamma = jnp.ones((H,), dtype=jnp.float32)
    beta = jnp.zeros((H,), dtype=jnp.float32)

    out = my_linear_forward(x, w1, b1, gamma, beta, w2, b2)
    jax.block_until_ready(out)
    assert out.shape == (B, S, 1), out.shape

    # Strict check against a reference using the same bf16 matmul inputs / f32 accumulation.
    ref_matched = reference_forward(x, w1, b1, gamma, beta, w2, b2, match_bf16=True)
    assert jnp.allclose(out, ref_matched, atol=1e-3, rtol=1e-3), (out, ref_matched)

    # Loose sanity check against the full-f32 PyTorch-equivalent forward (bf16 rounding only).
    ref_f32 = reference_forward(x, w1, b1, gamma, beta, w2, b2, match_bf16=False)
    assert jnp.allclose(out, ref_f32, atol=2e-1, rtol=2e-1), (out, ref_f32)

    print("KERNEL_OK")
</pallas_src>

<mosaic_0001>
module attributes {stable_mosaic.version = 11 : i64} {
  func.func @my_linear_kernel(%arg0: i32, %arg1: memref<16x32xf32, #tpu.memory_space<vmem>>, %arg2: memref<32x32xbf16, #tpu.memory_space<vmem>>, %arg3: memref<8x32xf32, #tpu.memory_space<vmem>>, %arg4: memref<16x1xf32, #tpu.memory_space<vmem>>) attributes {dimension_semantics = [#tpu.dimension_semantics<parallel>], iteration_bounds = array<i64: 1>, scalar_prefetch = 0 : i64, scratch_operands = 0 : i64, tpu.core_type = #tpu.core_type<tc>, window_params = [{transform_indices = @transform_0, window_bounds = array<i64: 16, 32>}, {pipeline_mode = #tpu.pipeline_mode<synchronous>, transform_indices = @transform_1, window_bounds = array<i64: 32, 32>}, {pipeline_mode = #tpu.pipeline_mode<synchronous>, transform_indices = @transform_2, window_bounds = array<i64: 8, 32>}, {transform_indices = @transform_3, window_bounds = array<i64: 16, 1>}]} {
    %c0 = arith.constant 0 : index
    %c0_0 = arith.constant 0 : index
    %0 = vector.load %arg1[%c0, %c0_0] : memref<16x32xf32, #tpu.memory_space<vmem>>, vector<16x32xf32>
    %1 = arith.truncf %0 : vector<16x32xf32> to vector<16x32xbf16>
    %c0_1 = arith.constant 0 : index
    %c0_2 = arith.constant 0 : index
    %2 = vector.load %arg2[%c0_1, %c0_2] : memref<32x32xbf16, #tpu.memory_space<vmem>>, vector<32x32xbf16>
    %cst = arith.constant dense<0.000000e+00> : vector<16x32xf32>
    %3 = tpu.matmul %1, %2, %cst {dimension_numbers = #tpu.dot_dimension_numbers<[1], [0], [0], [1], [0, 0, 1, 1], [], []>} : vector<16x32xbf16>, vector<32x32xbf16>, vector<16x32xf32> -> vector<16x32xf32>
    %c0_3 = arith.constant 0 : index
    %c0_4 = arith.constant 0 : index
    %4 = vector.load %arg3[%c0_3, %c0_4] : memref<8x32xf32, #tpu.memory_space<vmem>>, vector<1x32xf32>
    %5 = vector.broadcast %4 : vector<1x32xf32> to vector<16x32xf32>
    %6 = arith.addf %3, %5 : vector<16x32xf32>
    %cst_5 = arith.constant dense<0.000000e+00> : vector<16xf32>
    %7 = vector.multi_reduction <add>, %6, %cst_5 [1] : vector<16x32xf32> to vector<16xf32>
    %8 = vector.shape_cast %7 : vector<16xf32> to vector<16x1xf32>
    %cst_6 = arith.constant 3.125000e-02 : f32
    %9 = vector.broadcast %cst_6 : f32 to vector<16x1xf32>
    %10 = arith.mulf %8, %9 : vector<16x1xf32>
    %11 = vector.broadcast %10 : vector<16x1xf32> to vector<16x32xf32>
    %12 = arith.subf %6, %11 : vector<16x32xf32>
    %13 = arith.mulf %12, %12 : vector<16x32xf32>
    %cst_7 = arith.constant dense<0.000000e+00> : vector<16xf32>
    %14 = vector.multi_reduction <add>, %13, %cst_7 [1] : vector<16x32xf32> to vector<16xf32>
    %15 = vector.shape_cast %14 : vector<16xf32> to vector<16x1xf32>
    %cst_8 = arith.constant 3.125000e-02 : f32
    %16 = vector.broadcast %cst_8 : f32 to vector<16x1xf32>
    %17 = arith.mulf %15, %16 : vector<16x1xf32>
    %cst_9 = arith.constant 9.99999974E-6 : f32
    %18 = vector.broadcast %cst_9 : f32 to vector<16x1xf32>
    %19 = arith.addf %17, %18 : vector<16x1xf32>
    %20 = math.rsqrt %19 : vector<16x1xf32>
    %21 = vector.broadcast %20 : vector<16x1xf32> to vector<16x32xf32>
    %22 = arith.mulf %12, %21 : vector<16x32xf32>
    %c1 = arith.constant 1 : index
    %c0_10 = arith.constant 0 : index
    %23 = vector.load %arg3[%c1, %c0_10] : memref<8x32xf32, #tpu.memory_space<vmem>>, vector<1x32xf32>
    %24 = vector.broadcast %23 : vector<1x32xf32> to vector<16x32xf32>
    %25 = arith.mulf %22, %24 : vector<16x32xf32>
    %c2 = arith.constant 2 : index
    %c0_11 = arith.constant 0 : index
    %26 = vector.load %arg3[%c2, %c0_11] : memref<8x32xf32, #tpu.memory_space<vmem>>, vector<1x32xf32>
    %27 = vector.broadcast %26 : vector<1x32xf32> to vector<16x32xf32>
    %28 = arith.addf %25, %27 : vector<16x32xf32>
    %cst_12 = arith.constant 0.000000e+00 : f32
    %29 = vector.broadcast %cst_12 : f32 to vector<16x32xf32>
    %30 = arith.cmpf oge, %28, %29 : vector<16x32xf32>
    %cst_13 = arith.constant 1.000000e-01 : f32
    %31 = vector.broadcast %cst_13 : f32 to vector<16x32xf32>
    %32 = arith.mulf %31, %28 : vector<16x32xf32>
    %33 = arith.select %30, %28, %32 : vector<16x32xi1>, vector<16x32xf32>
    %c3 = arith.constant 3 : index
    %c0_14 = arith.constant 0 : index
    %34 = vector.load %arg3[%c3, %c0_14] : memref<8x32xf32, #tpu.memory_space<vmem>>, vector<1x32xf32>
    %35 = vector.broadcast %34 : vector<1x32xf32> to vector<16x32xf32>
    %36 = arith.mulf %33, %35 : vector<16x32xf32>
    %cst_15 = arith.constant dense<0.000000e+00> : vector<16xf32>
    %37 = vector.multi_reduction <add>, %36, %cst_15 [1] : vector<16x32xf32> to vector<16xf32>
    %38 = vector.shape_cast %37 : vector<16xf32> to vector<16x1xf32>
    %c4 = arith.constant 4 : index
    %c0_16 = arith.constant 0 : index
    %39 = vector.load %arg3[%c4, %c0_16] : memref<8x32xf32, #tpu.memory_space<vmem>>, vector<1x1xf32>
    %40 = vector.broadcast %39 : vector<1x1xf32> to vector<16x1xf32>
    %41 = arith.addf %38, %40 : vector<16x1xf32>
    %c0_17 = arith.constant 0 : index
    %c0_18 = arith.constant 0 : index
    %42 = vector.load %arg4[%c0_17, %c0_18] : memref<16x1xf32, #tpu.memory_space<vmem>>, vector<16x1xf32>
    tpu.vector_store %arg4[%c0_17, %c0_18], %41 {strides = array<i32>} : memref<16x1xf32, #tpu.memory_space<vmem>>, vector<16x1xf32>,
    return
  }
  func.func @transform_0(%arg0: i32) -> (i32, i32) {
    %c0_i32 = arith.constant 0 : i32
    %c0_i32_0 = arith.constant 0 : i32
    return %arg0, %c0_i32 : i32, i32
  }
  func.func @transform_1(%arg0: i32) -> (i32, i32) {
    %c0_i32 = arith.constant 0 : i32
    %c0_i32_0 = arith.constant 0 : i32
    %c0_i32_1 = arith.constant 0 : i32
    return %c0_i32, %c0_i32_0 : i32, i32
  }
  func.func @transform_2(%arg0: i32) -> (i32, i32) {
    %c0_i32 = arith.constant 0 : i32
    %c0_i32_0 = arith.constant 0 : i32
    %c0_i32_1 = arith.constant 0 : i32
    return %c0_i32, %c0_i32_0 : i32, i32
  }
  func.func @transform_3(%arg0: i32) -> (i32, i32) {
    %c0_i32 = arith.constant 0 : i32
    %c0_i32_0 = arith.constant 0 : i32
    return %arg0, %c0_i32 : i32, i32
  }
}

module attributes {stable_mosaic.version = 11 : i64} {
  func.func @my_linear_kernel(%arg0: i32, %arg1: memref<16x32xf32, #tpu.memory_space<vmem>>, %arg2: memref<32x32xbf16, #tpu.memory_space<vmem>>, %arg3: memref<8x32xf32, #tpu.memory_space<vmem>>, %arg4: memref<16x1xf32, #tpu.memory_space<vmem>>) attributes {dimension_semantics = [#tpu.dimension_semantics<parallel>], iteration_bounds = array<i64: 1>, scalar_prefetch = 0 : i64, scratch_operands = 0 : i64, tpu.core_type = #tpu.core_type<tc>, window_params = [{transform_indices = @transform_0, window_bounds = array<i64: 16, 32>}, {pipeline_mode = #tpu.pipeline_mode<synchronous>, transform_indices = @transform_1, window_bounds = array<i64: 32, 32>}, {pipeline_mode = #tpu.pipeline_mode<synchronous>, transform_indices = @transform_2, window_bounds = array<i64: 8, 32>}, {transform_indices = @transform_3, window_bounds = array<i64: 16, 1>}]} {
    %c0 = arith.constant 0 : index
    %c0_0 = arith.constant 0 : index
    %0 = vector.load %arg1[%c0, %c0_0] : memref<16x32xf32, #tpu.memory_space<vmem>>, vector<16x32xf32>
    %1 = arith.truncf %0 : vector<16x32xf32> to vector<16x32xbf16>
    %c0_1 = arith.constant 0 : index
    %c0_2 = arith.constant 0 : index
    %2 = vector.load %arg2[%c0_1, %c0_2] : memref<32x32xbf16, #tpu.memory_space<vmem>>, vector<32x32xbf16>
    %cst = arith.constant dense<0.000000e+00> : vector<16x32xf32>
    %3 = tpu.matmul %1, %2, %cst {dimension_numbers = #tpu.dot_dimension_numbers<[1], [0], [0], [1], [0, 0, 1, 1], [], []>} : vector<16x32xbf16>, vector<32x32xbf16>, vector<16x32xf32> -> vector<16x32xf32>
    %c0_3 = arith.constant 0 : index
    %c0_4 = arith.constant 0 : index
    %4 = vector.load %arg3[%c0_3, %c0_4] : memref<8x32xf32, #tpu.memory_space<vmem>>, vector<1x32xf32>
    %5 = vector.broadcast %4 : vector<1x32xf32> to vector<16x32xf32>
    %6 = arith.addf %3, %5 : vector<16x32xf32>
    %cst_5 = arith.constant dense<0.000000e+00> : vector<16xf32>
    %7 = vector.multi_reduction <add>, %6, %cst_5 [1] : vector<16x32xf32> to vector<16xf32>
    %8 = vector.shape_cast %7 : vector<16xf32> to vector<16x1xf32>
    %cst_6 = arith.constant 3.125000e-02 : f32
    %9 = vector.broadcast %cst_6 : f32 to vector<16x1xf32>
    %10 = arith.mulf %8, %9 : vector<16x1xf32>
    %11 = vector.broadcast %10 : vector<16x1xf32> to vector<16x32xf32>
    %12 = arith.subf %6, %11 : vector<16x32xf32>
    %13 = arith.mulf %12, %12 : vector<16x32xf32>
    %cst_7 = arith.constant dense<0.000000e+00> : vector<16xf32>
    %14 = vector.multi_reduction <add>, %13, %cst_7 [1] : vector<16x32xf32> to vector<16xf32>
    %15 = vector.shape_cast %14 : vector<16xf32> to vector<16x1xf32>
    %cst_8 = arith.constant 3.125000e-02 : f32
    %16 = vector.broadcast %cst_8 : f32 to vector<16x1xf32>
    %17 = arith.mulf %15, %16 : vector<16x1xf32>
    %cst_9 = arith.constant 9.99999974E-6 : f32
    %18 = vector.broadcast %cst_9 : f32 to vector<16x1xf32>
    %19 = arith.addf %17, %18 : vector<16x1xf32>
    %20 = math.rsqrt %19 : vector<16x1xf32>
    %21 = vector.broadcast %20 : vector<16x1xf32> to vector<16x32xf32>
    %22 = arith.mulf %12, %21 : vector<16x32xf32>
    %c1 = arith.constant 1 : index
    %c0_10 = arith.constant 0 : index
    %23 = vector.load %arg3[%c1, %c0_10] : memref<8x32xf32, #tpu.memory_space<vmem>>, vector<1x32xf32>
    %24 = vector.broadcast %23 : vector<1x32xf32> to vector<16x32xf32>
    %25 = arith.mulf %22, %24 : vector<16x32xf32>
    %c2 = arith.constant 2 : index
    %c0_11 = arith.constant 0 : index
    %26 = vector.load %arg3[%c2, %c0_11] : memref<8x32xf32, #tpu.memory_space<vmem>>, vector<1x32xf32>
    %27 = vector.broadcast %26 : vector<1x32xf32> to vector<16x32xf32>
    %28 = arith.addf %25, %27 : vector<16x32xf32>
    %cst_12 = arith.constant 0.000000e+00 : f32
    %29 = vector.broadcast %cst_12 : f32 to vector<16x32xf32>
    %30 = arith.cmpf oge, %28, %29 : vector<16x32xf32>
    %cst_13 = arith.constant 1.000000e-01 : f32
    %31 = vector.broadcast %cst_13 : f32 to vector<16x32xf32>
    %32 = arith.mulf %31, %28 : vector<16x32xf32>
    %33 = arith.select %30, %28, %32 : vector<16x32xi1>, vector<16x32xf32>
    %c3 = arith.constant 3 : index
    %c0_14 = arith.constant 0 : index
    %34 = vector.load %arg3[%c3, %c0_14] : memref<8x32xf32, #tpu.memory_space<vmem>>, vector<1x32xf32>
    %35 = vector.broadcast %34 : vector<1x32xf32> to vector<16x32xf32>
    %36 = arith.mulf %33, %35 : vector<16x32xf32>
    %cst_15 = arith.constant dense<0.000000e+00> : vector<16xf32>
    %37 = vector.multi_reduction <add>, %36, %cst_15 [1] : vector<16x32xf32> to vector<16xf32>
    %38 = vector.shape_cast %37 : vector<16xf32> to vector<16x1xf32>
    %c4 = arith.constant 4 : index
    %c0_16 = arith.constant 0 : index
    %39 = vector.load %arg3[%c4, %c0_16] : memref<8x32xf32, #tpu.memory_space<vmem>>, vector<1x1xf32>
    %40 = vector.broadcast %39 : vector<1x1xf32> to vector<16x1xf32>
    %41 = arith.addf %38, %40 : vector<16x1xf32>
    %c0_17 = arith.constant 0 : index
    %c0_18 = arith.constant 0 : index
    %42 = vector.load %arg4[%c0_17, %c0_18] : memref<16x1xf32, #tpu.memory_space<vmem>>, vector<16x1xf32>
    tpu.vector_store %arg4[%c0_17, %c0_18], %41 {strides = array<i32>} : memref<16x1xf32, #tpu.memory_space<vmem>>, vector<16x1xf32>,
    return
  }
  func.func @transform_0(%arg0: i32) -> (i32, i32) {
    %c0_i32 = arith.constant 0 : i32
    %c0_i32_0 = arith.constant 0 : i32
    return %arg0, %c0_i32 : i32, i32
  }
  func.func @transform_1(%arg0: i32) -> (i32, i32) {
    %c0_i32 = arith.constant 0 : i32
    %c0_i32_0 = arith.constant 0 : i32
    %c0_i32_1 = arith.constant 0 : i32
    return %c0_i32, %c0_i32_0 : i32, i32
  }
  func.func @transform_2(%arg0: i32) -> (i32, i32) {
    %c0_i32 = arith.constant 0 : i32
    %c0_i32_0 = arith.constant 0 : i32
    %c0_i32_1 = arith.constant 0 : i32
    return %c0_i32, %c0_i32_0 : i32, i32
  }
  func.func @transform_3(%arg0: i32) -> (i32, i32) {
    %c0_i32 = arith.constant 0 : i32
    %c0_i32_0 = arith.constant 0 : i32
    return %arg0, %c0_i32 : i32, i32
  }
}

</mosaic_0001>

<llo_original>
// kernel: tpu_custom_call.1
$region0: #{tpu_custom_call.1}
  #allocation0 [shape = 'u32[]', space=smem, size = 0x4, offset = 0x4, fixed_abs, tag = 'smem constant byte address 0x4 - core index']
  #allocation1 [shape = 'u32[144,128]{1,0:T(1,128)}', space=vmem, size = 0x12000, scoped, tag = 'internal scratch']
  %s0 = inlined_call_operand.hbm [shape: f32[16,32], index: 0, kind: input, shape index: {}]
  %s1 = inlined_call_operand.hbm [shape: bf16[32,32], index: 1, kind: input, shape index: {}]
  %s2 = inlined_call_operand.hbm [shape: f32[8,32], index: 2, kind: input, shape index: {}]
  %s3 = inlined_call_operand.vmem [shape: f32[16,1], index: 3, kind: output, shape index: {}]
  %s4 = sld [smem:[#allocation0]]
  $region34: #{tpu_custom_call.1} parent=0
    _
  %s6 = ssub.s32 1, %s4
  %s7 = scalar_select 0, %s6, %s4
  $region1: #{tpu_custom_call.1} parent=0
    #allocation2 [shape = 'u8[8192]{0}', space=vmem, size = 0x2000, scoped, tag = 'input window, operand 0, single buffered']
    #allocation3 [shape = 's32[1]{0}', space=sflag, size = 0x4, scoped, tag = 'scoped memory for tpu_custom_call.1']
    #allocation4 [shape = 'u8[8192]{0}', space=vmem, size = 0x2000, scoped, tag = 'input window, operand 1, single buffered']
    #allocation5 [shape = 's32[1]{0}', space=sflag, size = 0x4, scoped, tag = 'scoped memory for tpu_custom_call.1']
    #allocation6 [shape = 'u8[4096]{0}', space=vmem, size = 0x1000, scoped, tag = 'input window, operand 2, single buffered']
    %8 = vsyncpa [#allocation3], 0
    %9 = vsyncpa [#allocation5], 0
    // Predicated region
    $region2: #{tpu_custom_call.1} parent=1 // pred_check
      _
    $region3: #{tpu_custom_call.1} parent=1 // pred_check_branch
      %11 = sbr.rel (0) target = $region5
    $region4: #{tpu_custom_call.1} parent=1 // pred_region
      %s13 = ssub.s32 256, 256
      %14 = vsyncadd [#allocation3], %s13
      %s15 = sshll.u32 [#allocation2], 4
      %s16 = int_to_ptr.vmem [resolvable:$true] %s15
      %21 = dma.hbm_to_vmem [thread:$0]  %s0, 256, %s16, [#allocation3], 128, 128, 8
    $region5: #{tpu_custom_call.1} parent=1 // pred_fallthru
      _
    // Predicated region
    $region6: #{tpu_custom_call.1} parent=1 // pred_check
      _
    $region7: #{tpu_custom_call.1} parent=1 // pred_check_branch
      %23 = sbr.rel (0) target = $region9
    $region8: #{tpu_custom_call.1} parent=1 // pred_region
      %s25 = ssub.s32 256, 256
      %26 = vsyncadd [#allocation5], %s25
      %s27 = sshll.u32 [#allocation4], 4
      %s28 = int_to_ptr.vmem [resolvable:$true] %s27
      %33 = dma.hbm_to_vmem [thread:$0]  %s1, 256, %s28, [#allocation5], 64, 64, 4
    $region9: #{tpu_custom_call.1} parent=1 // pred_fallthru
      _
    // Predicated region
    $region10: #{tpu_custom_call.1} parent=1 // pred_check
      _
    $region11: #{tpu_custom_call.1} parent=1 // pred_check_branch
      %35 = sbr.rel (0) target = $region13
    $region12: #{tpu_custom_call.1} parent=1 // pred_region
      %s37 = ssub.s32 128, 128
      %38 = vsyncadd [#allocation5], %s37
      %s40 = sshll.u32 [#allocation6], 4
      %s41 = int_to_ptr.vmem [resolvable:$true] %s40
      %43 = dma.hbm_to_vmem [thread:$0]  %s2, 128, %s41, [#allocation5]
    $region13: #{tpu_custom_call.1} parent=1 // pred_fallthru
      _
    // Predicated region
    $region14: #{tpu_custom_call.1} parent=1 // pred_check
      _
    $region15: #{tpu_custom_call.1} parent=1 // pred_check_branch
      %45 = sbr.rel (0) target = $region17
    $region16: #{tpu_custom_call.1} parent=1 // pred_region
      %46 = dma.done [#allocation3], 256
    $region17: #{tpu_custom_call.1} parent=1 // pred_fallthru
      _
    // Predicated region
    $region18: #{tpu_custom_call.1} parent=1 // pred_check
      _
    $region19: #{tpu_custom_call.1} parent=1 // pred_check_branch
      %48 = sbr.rel (0) target = $region21
    $region20: #{tpu_custom_call.1} parent=1 // pred_region
      %49 = dma.done [#allocation5], 256
    $region21: #{tpu_custom_call.1} parent=1 // pred_fallthru
      _
    // Predicated region
    $region22: #{tpu_custom_call.1} parent=1 // pred_check
      _
    $region23: #{tpu_custom_call.1} parent=1 // pred_check_branch
      %51 = sbr.rel (0) target = $region25
    $region24: #{tpu_custom_call.1} parent=1 // pred_region
      %52 = dma.done [#allocation5], 128
    $region25: #{tpu_custom_call.1} parent=1 // pred_fallthru
      _
    %v54 = vld [vmem:[#allocation2] sm:$0xff]
    %v55 = vld [vmem:[#allocation2 + $0x8] sm:$0xff]
    %v56 = vpack.c.bf16 %v55, %v54
    %v57 = vld [vmem:[#allocation4] sm:$0xf]
    %v58 = vld [vmem:[#allocation4 + $0x4] sm:$0xf]
    %v59 = vld [vmem:[#allocation4 + $0x8] sm:$0xf]
    %v60 = vld [vmem:[#allocation4 + $0xc] sm:$0xf]
    %v61 = vld [vmem:[#allocation6] sm:$0x1]
    %v62 = vlaneseq
    %v63 = vshrl.u32 %v62, 7
    %v64 = vsub.s32 0, %v63
    %v65 = vrot.slane %v61, %v64
    %v70 = vunpack.c.l.b16 %v57
    %v71 = vunpack.c.l.b16 %v58
    %v72 = vunpack.c.l.b16 %v59
    %v73 = vunpack.c.l.b16 %v60
    %v74 = vpack.c.b16 %v71, %v70
    %v75 = vpack.c.b16 %v73, %v72
    %vm78 = vcmask 261120
    %v80 = vsel %vm78, %v56, 0
    %82 = vmatprep.subr.bf16.mxu0 0
    %83 = vmatpush1.bf16.msra.mxu0 %v74
    %84 = vmatprep.subr.bf16.mxu0 0
    %85 = vmatpush1.bf16.msra.mxu0 %v75
    %86 = vmatprep.subr.bf16.mxu0 0
    %87 = vmatpush1.bf16.msra.mxu0 0
    %88 = vmatprep.subr.bf16.mxu0 0
    %89 = vmatpush1.bf16.msra.mxu0 0
    %90 = vmatprep.subr.bf16.mxu0 0
    %91 = vmatpush1.bf16.msra.mxu0 0
    %92 = vmatprep.subr.bf16.mxu0 0
    %93 = vmatpush1.bf16.msra.mxu0 0
    %94 = vmatprep.subr.bf16.mxu0 0
    %95 = vmatpush1.bf16.msra.mxu0 0
    %96 = vmatprep.subr.bf16.mxu0 0
    %97 = vmatpush1.bf16.msra.mxu0 0
    %98 = vmatprep.subr.bf16.mxu0 0
    %99 = vmatpush1.bf16.msra.mxu0 0
    %100 = vmatprep.subr.bf16.mxu0 0
    %101 = vmatpush1.bf16.msra.mxu0 0
    %102 = vmatprep.subr.bf16.mxu0 0
    %103 = vmatpush1.bf16.msra.mxu0 0
    %104 = vmatprep.subr.bf16.mxu0 0
    %105 = vmatpush1.bf16.msra.mxu0 0
    %106 = vmatprep.subr.bf16.mxu0 0
    %107 = vmatpush1.bf16.msra.mxu0 0
    %108 = vmatprep.subr.bf16.mxu0 0
    %109 = vmatpush1.bf16.msra.mxu0 0
    %110 = vmatprep.subr.bf16.mxu0 0
    %111 = vmatpush1.bf16.msra.mxu0 0
    %112 = vmatprep.subr.bf16.mxu0 0
    %113 = vmatpush1.bf16.msra.mxu0 0
    %114 = vmatprep.mubr.bf16.mxu0 0
    %115 = vmatmul.mubr.bf16.gmra.mrb[0].mxu0 %v80
    %v116 = vpop.f32.mrb[0].mxu0
    %v117 = vadd.f32 %v65, %v116
    %v118 = vpop.f32.mrb[0].mxu0
    %v119 = vpop.f32.mrb[0].mxu0
    %v120 = vadd.f32 %v65, %v119
    %v121 = vpop.f32.mrb[0].mxu0
    %122 = vdwg.mxu0
    %v123 = vsel %vm78, %v117, 0.0
    %124 = vadd.xlane.f32.xlu0 %v123
    %v125 = vpop.xlane.xlu0 %124
    %v126 = vsel %vm78, %v120, 0.0
    %127 = vadd.xlane.f32.xlu0 %v126
    %v128 = vpop.xlane.xlu0 %127
    %v129 = vmul.f32 %v125, 0.03125
    %v130 = vmul.f32 %v128, 0.03125
    %v131 = vsub.f32 %v117, %v129
    %v132 = vsub.f32 %v120, %v130
    %v133 = vmul.f32 %v131, %v131
    %v134 = vmul.f32 %v132, %v132
    %v135 = vsel %vm78, %v133, 0.0
    %136 = vadd.xlane.f32.xlu0 %v135
    %v137 = vpop.xlane.xlu0 %136
    %v138 = vsel %vm78, %v134, 0.0
    %139 = vadd.xlane.f32.xlu0 %v138
    %v140 = vpop.xlane.xlu0 %139
    %v141 = vmul.f32 %v137, 0.03125
    %v142 = vmul.f32 %v140, 0.03125
    %v143 = vadd.f32 %v141, 1e-05
    %v144 = vadd.f32 %v142, 1e-05
    %v145 = vrsqrt.pop %v143
    %v146 = vrsqrt.pop %v144
    %v147 = vmul.f32 %v131, %v145
    %v148 = vmul.f32 %v132, %v146
    %v149 = vld [vmem:[#allocation6 + $0x1] sm:$0x1]
    %v150 = vlaneseq
    %v151 = vshrl.u32 %v150, 7
    %v152 = vsub.s32 0, %v151
    %v153 = vrot.slane %v149, %v152
    %v154 = vmul.f32 %v147, %v153
    %v155 = vmul.f32 %v148, %v153
    %v156 = vld [vmem:[#allocation6 + $0x2] sm:$0x1]
    %v157 = vlaneseq
    %v158 = vshrl.u32 %v157, 7
    %v159 = vsub.s32 0, %v158
    %v160 = vrot.slane %v156, %v159
    %v161 = vadd.f32 %v154, %v160
    %v162 = vadd.f32 %v155, %v160
    %vm163 = vcmp.ge.f32.partialorder %v161, 0.0
    %vm164 = vcmp.ge.f32.partialorder %v162, 0.0
    %v165 = vmul.f32 %v161, 0.1
    %v166 = vmul.f32 %v162, 0.1
    %v167 = vsel %vm163, %v161, %v165
    %v168 = vsel %vm164, %v162, %v166
    %v169 = vld [vmem:[#allocation6 + $0x3] sm:$0x1]
    %v170 = vlaneseq
    %v171 = vshrl.u32 %v170, 7
    %v172 = vsub.s32 0, %v171
    %v173 = vrot.slane %v169, %v172
    %v174 = vmul.f32 %v167, %v173
    %v175 = vmul.f32 %v168, %v173
    %v176 = vsel %vm78, %v174, 0.0
    %177 = vadd.xlane.f32.xlu0 %v176
    %v178 = vpop.xlane.xlu0 %177
    %v179 = vsel %vm78, %v175, 0.0
    %180 = vadd.xlane.f32.xlu0 %v179
    %v181 = vpop.xlane.xlu0 %180
    %v182 = vld [vmem:[#allocation6 + $0x4] sm:$0x1]
    %v183 = vlaneseq
    %v184 = vshrl.u32 %v183, 7
    %v185 = vsub.s32 0, %v184
    %v186 = vrot.slane %v182, %v185
    %v187 = vadd.f32 %v178, %v186
    %v188 = vadd.f32 %v181, %v186
    %vm189 = vcmask 7168
    %190 = vst.msk [vmem:[%s3] sm:$0xff] %vm189, %v187
    %191 = vst.msk [vmem:[%s3 + $0x8] sm:$0xff] %vm189, %v188
    // Predicated region
    $region26: #{tpu_custom_call.1} parent=1 // pred_check
      _
    $region27: #{tpu_custom_call.1} parent=1 // pred_check_branch
      %193 = sbr.rel (0) target = $region29
    $region28: #{tpu_custom_call.1} parent=1 // pred_region
      _
    $region29: #{tpu_custom_call.1} parent=1 // pred_fallthru
      _
    // Predicated region
    $region30: #{tpu_custom_call.1} parent=1 // pred_check
      _
    $region31: #{tpu_custom_call.1} parent=1 // pred_check_branch
      %195 = sbr.rel (0) target = $region33
    $region32: #{tpu_custom_call.1} parent=1 // pred_region
      _
    $region33: #{tpu_custom_call.1} parent=1 // pred_fallthru
      _
    %196 = vsyncpa [#allocation3], 1
    %197 = vsyncpa [#allocation5], 1

// kernel: tpu_custom_call.1
$region0: #{tpu_custom_call.1}
  #allocation0 [shape = 'u32[]', space=smem, size = 0x4, offset = 0x4, fixed_abs, tag = 'smem constant byte address 0x4 - core index']
  #allocation1 [shape = 'u32[144,128]{1,0:T(1,128)}', space=vmem, size = 0x12000, scoped, tag = 'internal scratch']
  %s0 = inlined_call_operand.hbm [shape: f32[16,32], index: 0, kind: input, shape index: {}]
  %s1 = inlined_call_operand.hbm [shape: bf16[32,32], index: 1, kind: input, shape index: {}]
  %s2 = inlined_call_operand.hbm [shape: f32[8,32], index: 2, kind: input, shape index: {}]
  %s3 = inlined_call_operand.vmem [shape: f32[16,1], index: 3, kind: output, shape index: {}]
  %s4 = sld [smem:[#allocation0]]
  $region34: #{tpu_custom_call.1} parent=0
    _
  %s6 = ssub.s32 1, %s4
  %s7 = scalar_select 0, %s6, %s4
  $region1: #{tpu_custom_call.1} parent=0
    #allocation2 [shape = 'u8[8192]{0}', space=vmem, size = 0x2000, scoped, tag = 'input window, operand 0, single buffered']
    #allocation3 [shape = 's32[1]{0}', space=sflag, size = 0x4, scoped, tag = 'scoped memory for tpu_custom_call.1']
    #allocation4 [shape = 'u8[8192]{0}', space=vmem, size = 0x2000, scoped, tag = 'input window, operand 1, single buffered']
    #allocation5 [shape = 's32[1]{0}', space=sflag, size = 0x4, scoped, tag = 'scoped memory for tpu_custom_call.1']
    #allocation6 [shape = 'u8[4096]{0}', space=vmem, size = 0x1000, scoped, tag = 'input window, operand 2, single buffered']
    %8 = vsyncpa [#allocation3], 0
    %9 = vsyncpa [#allocation5], 0
    // Predicated region
    $region2: #{tpu_custom_call.1} parent=1 // pred_check
      _
    $region3: #{tpu_custom_call.1} parent=1 // pred_check_branch
      %11 = sbr.rel (0) target = $region5
    $region4: #{tpu_custom_call.1} parent=1 // pred_region
      %s13 = ssub.s32 256, 256
      %14 = vsyncadd [#allocation3], %s13
      %s15 = sshll.u32 [#allocation2], 4
      %s16 = int_to_ptr.vmem [resolvable:$true] %s15
      %21 = dma.hbm_to_vmem [thread:$0]  %s0, 256, %s16, [#allocation3], 128, 128, 8
    $region5: #{tpu_custom_call.1} parent=1 // pred_fallthru
      _
    // Predicated region
    $region6: #{tpu_custom_call.1} parent=1 // pred_check
      _
    $region7: #{tpu_custom_call.1} parent=1 // pred_check_branch
      %23 = sbr.rel (0) target = $region9
    $region8: #{tpu_custom_call.1} parent=1 // pred_region
      %s25 = ssub.s32 256, 256
      %26 = vsyncadd [#allocation5], %s25
      %s27 = sshll.u32 [#allocation4], 4
      %s28 = int_to_ptr.vmem [resolvable:$true] %s27
      %33 = dma.hbm_to_vmem [thread:$0]  %s1, 256, %s28, [#allocation5], 64, 64, 4
    $region9: #{tpu_custom_call.1} parent=1 // pred_fallthru
      _
    // Predicated region
    $region10: #{tpu_custom_call.1} parent=1 // pred_check
      _
    $region11: #{tpu_custom_call.1} parent=1 // pred_check_branch
      %35 = sbr.rel (0) target = $region13
    $region12: #{tpu_custom_call.1} parent=1 // pred_region
      %s37 = ssub.s32 128, 128
      %38 = vsyncadd [#allocation5], %s37
      %s40 = sshll.u32 [#allocation6], 4
      %s41 = int_to_ptr.vmem [resolvable:$true] %s40
      %43 = dma.hbm_to_vmem [thread:$0]  %s2, 128, %s41, [#allocation5]
    $region13: #{tpu_custom_call.1} parent=1 // pred_fallthru
      _
    // Predicated region
    $region14: #{tpu_custom_call.1} parent=1 // pred_check
      _
    $region15: #{tpu_custom_call.1} parent=1 // pred_check_branch
      %45 = sbr.rel (0) target = $region17
    $region16: #{tpu_custom_call.1} parent=1 // pred_region
      %46 = dma.done [#allocation3], 256
    $region17: #{tpu_custom_call.1} parent=1 // pred_fallthru
      _
    // Predicated region
    $region18: #{tpu_custom_call.1} parent=1 // pred_check
      _
    $region19: #{tpu_custom_call.1} parent=1 // pred_check_branch
      %48 = sbr.rel (0) target = $region21
    $region20: #{tpu_custom_call.1} parent=1 // pred_region
      %49 = dma.done [#allocation5], 256
    $region21: #{tpu_custom_call.1} parent=1 // pred_fallthru
      _
    // Predicated region
    $region22: #{tpu_custom_call.1} parent=1 // pred_check
      _
    $region23: #{tpu_custom_call.1} parent=1 // pred_check_branch
      %51 = sbr.rel (0) target = $region25
    $region24: #{tpu_custom_call.1} parent=1 // pred_region
      %52 = dma.done [#allocation5], 128
    $region25: #{tpu_custom_call.1} parent=1 // pred_fallthru
      _
    %v54 = vld [vmem:[#allocation2] sm:$0xff]
    %v55 = vld [vmem:[#allocation2 + $0x8] sm:$0xff]
    %v56 = vpack.c.bf16 %v55, %v54
    %v57 = vld [vmem:[#allocation4] sm:$0xf]
    %v58 = vld [vmem:[#allocation4 + $0x4] sm:$0xf]
    %v59 = vld [vmem:[#allocation4 + $0x8] sm:$0xf]
    %v60 = vld [vmem:[#allocation4 + $0xc] sm:$0xf]
    %v61 = vld [vmem:[#allocation6] sm:$0x1]
    %v62 = vlaneseq
    %v63 = vshrl.u32 %v62, 7
    %v64 = vsub.s32 0, %v63
    %v65 = vrot.slane %v61, %v64
    %v70 = vunpack.c.l.b16 %v57
    %v71 = vunpack.c.l.b16 %v58
    %v72 = vunpack.c.l.b16 %v59
    %v73 = vunpack.c.l.b16 %v60
    %v74 = vpack.c.b16 %v71, %v70
    %v75 = vpack.c.b16 %v73, %v72
    %vm78 = vcmask 261120
    %v80 = vsel %vm78, %v56, 0
    %82 = vmatprep.subr.bf16.mxu0 0
    %83 = vmatpush1.bf16.msra.mxu0 %v74
    %84 = vmatprep.subr.bf16.mxu0 0
    %85 = vmatpush1.bf16.msra.mxu0 %v75
    %86 = vmatprep.subr.bf16.mxu0 0
    %87 = vmatpush1.bf16.msra.mxu0 0
    %88 = vmatprep.subr.bf16.mxu0 0
    %89 = vmatpush1.bf16.msra.mxu0 0
    %90 = vmatprep.subr.bf16.mxu0 0
    %91 = vmatpush1.bf16.msra.mxu0 0
    %92 = vmatprep.subr.bf16.mxu0 0
    %93 = vmatpush1.bf16.msra.mxu0 0
    %94 = vmatprep.subr.bf16.mxu0 0
    %95 = vmatpush1.bf16.msra.mxu0 0
    %96 = vmatprep.subr.bf16.mxu0 0
    %97 = vmatpush1.bf16.msra.mxu0 0
    %98 = vmatprep.subr.bf16.mxu0 0
    %99 = vmatpush1.bf16.msra.mxu0 0
    %100 = vmatprep.subr.bf16.mxu0 0
    %101 = vmatpush1.bf16.msra.mxu0 0
    %102 = vmatprep.subr.bf16.mxu0 0
    %103 = vmatpush1.bf16.msra.mxu0 0
    %104 = vmatprep.subr.bf16.mxu0 0
    %105 = vmatpush1.bf16.msra.mxu0 0
    %106 = vmatprep.subr.bf16.mxu0 0
    %107 = vmatpush1.bf16.msra.mxu0 0
    %108 = vmatprep.subr.bf16.mxu0 0
    %109 = vmatpush1.bf16.msra.mxu0 0
    %110 = vmatprep.subr.bf16.mxu0 0
    %111 = vmatpush1.bf16.msra.mxu0 0
    %112 = vmatprep.subr.bf16.mxu0 0
    %113 = vmatpush1.bf16.msra.mxu0 0
    %114 = vmatprep.mubr.bf16.mxu0 0
    %115 = vmatmul.mubr.bf16.gmra.mrb[0].mxu0 %v80
    %v116 = vpop.f32.mrb[0].mxu0
    %v117 = vadd.f32 %v65, %v116
    %v118 = vpop.f32.mrb[0].mxu0
    %v119 = vpop.f32.mrb[0].mxu0
    %v120 = vadd.f32 %v65, %v119
    %v121 = vpop.f32.mrb[0].mxu0
    %122 = vdwg.mxu0
    %v123 = vsel %vm78, %v117, 0.0
    %124 = vadd.xlane.f32.xlu0 %v123
    %v125 = vpop.xlane.xlu0 %124
    %v126 = vsel %vm78, %v120, 0.0
    %127 = vadd.xlane.f32.xlu0 %v126
    %v128 = vpop.xlane.xlu0 %127
    %v129 = vmul.f32 %v125, 0.03125
    %v130 = vmul.f32 %v128, 0.03125
    %v131 = vsub.f32 %v117, %v129
    %v132 = vsub.f32 %v120, %v130
    %v133 = vmul.f32 %v131, %v131
    %v134 = vmul.f32 %v132, %v132
    %v135 = vsel %vm78, %v133, 0.0
    %136 = vadd.xlane.f32.xlu0 %v135
    %v137 = vpop.xlane.xlu0 %136
    %v138 = vsel %vm78, %v134, 0.0
    %139 = vadd.xlane.f32.xlu0 %v138
    %v140 = vpop.xlane.xlu0 %139
    %v141 = vmul.f32 %v137, 0.03125
    %v142 = vmul.f32 %v140, 0.03125
    %v143 = vadd.f32 %v141, 1e-05
    %v144 = vadd.f32 %v142, 1e-05
    %v145 = vrsqrt.pop %v143
    %v146 = vrsqrt.pop %v144
    %v147 = vmul.f32 %v131, %v145
    %v148 = vmul.f32 %v132, %v146
    %v149 = vld [vmem:[#allocation6 + $0x1] sm:$0x1]
    %v150 = vlaneseq
    %v151 = vshrl.u32 %v150, 7
    %v152 = vsub.s32 0, %v151
    %v153 = vrot.slane %v149, %v152
    %v154 = vmul.f32 %v147, %v153
    %v155 = vmul.f32 %v148, %v153
    %v156 = vld [vmem:[#allocation6 + $0x2] sm:$0x1]
    %v157 = vlaneseq
    %v158 = vshrl.u32 %v157, 7
    %v159 = vsub.s32 0, %v158
    %v160 = vrot.slane %v156, %v159
    %v161 = vadd.f32 %v154, %v160
    %v162 = vadd.f32 %v155, %v160
    %vm163 = vcmp.ge.f32.partialorder %v161, 0.0
    %vm164 = vcmp.ge.f32.partialorder %v162, 0.0
    %v165 = vmul.f32 %v161, 0.1
    %v166 = vmul.f32 %v162, 0.1
    %v167 = vsel %vm163, %v161, %v165
    %v168 = vsel %vm164, %v162, %v166
    %v169 = vld [vmem:[#allocation6 + $0x3] sm:$0x1]
    %v170 = vlaneseq
    %v171 = vshrl.u32 %v170, 7
    %v172 = vsub.s32 0, %v171
    %v173 = vrot.slane %v169, %v172
    %v174 = vmul.f32 %v167, %v173
    %v175 = vmul.f32 %v168, %v173
    %v176 = vsel %vm78, %v174, 0.0
    %177 = vadd.xlane.f32.xlu0 %v176
    %v178 = vpop.xlane.xlu0 %177
    %v179 = vsel %vm78, %v175, 0.0
    %180 = vadd.xlane.f32.xlu0 %v179
    %v181 = vpop.xlane.xlu0 %180
    %v182 = vld [vmem:[#allocation6 + $0x4] sm:$0x1]
    %v183 = vlaneseq
    %v184 = vshrl.u32 %v183, 7
    %v185 = vsub.s32 0, %v184
    %v186 = vrot.slane %v182, %v185
    %v187 = vadd.f32 %v178, %v186
    %v188 = vadd.f32 %v181, %v186
    %vm189 = vcmask 7168
    %190 = vst.msk [vmem:[%s3] sm:$0xff] %vm189, %v187
    %191 = vst.msk [vmem:[%s3 + $0x8] sm:$0xff] %vm189, %v188
    // Predicated region
    $region26: #{tpu_custom_call.1} parent=1 // pred_check
      _
    $region27: #{tpu_custom_call.1} parent=1 // pred_check_branch
      %193 = sbr.rel (0) target = $region29
    $region28: #{tpu_custom_call.1} parent=1 // pred_region
      _
    $region29: #{tpu_custom_call.1} parent=1 // pred_fallthru
      _
    // Predicated region
    $region30: #{tpu_custom_call.1} parent=1 // pred_check
      _
    $region31: #{tpu_custom_call.1} parent=1 // pred_check_branch
      %195 = sbr.rel (0) target = $region33
    $region32: #{tpu_custom_call.1} parent=1 // pred_region
      _
    $region33: #{tpu_custom_call.1} parent=1 // pred_fallthru
      _
    %196 = vsyncpa [#allocation3], 1
    %197 = vsyncpa [#allocation5], 1

</llo_original>
